<compile_context>
chip_gen: v7x
topology: tpu7x:2x2x1
jax: 0.10.0
libtpu: 0.0.40
codegen_flags: <defaults>
</compile_context>

<pallas_src>
import jax
import jax.numpy as jnp
from jax.experimental import pallas as pl
from jax.experimental.pallas import tpu as pltpu

tvq_codebook_size = 128   # K
tvq_embedding_dim = 32    # D
tvq_latent_size = 8       # L

_K = tvq_codebook_size
_D = tvq_embedding_dim
_PACK = 128 // _D          # 4 latent vectors per 128-lane row
_LD = _PACK * _D           # 128 : packed latent lane width
_LK = _PACK * _K           # 512 : packed distance lane width


def _vq_kernel(xp_ref, wd_ref, wg_ref, c2_ref, q_ref):
    # xp_ref: (TNp, 128) bf16 packed latents
    # wd_ref: (128, 512) bf16 block-diag(-2 * codebook^T)
    # wg_ref: (512, 128) f32  block-diag(codebook)
    # c2_ref: (1, 512)   f32  tiled ||c||^2
    # q_ref : (TNp, 128) f32  packed quantized latents

    # bf16 distance matmul, f32 accumulate (argmin only needs relative order;
    # the row-constant ||x||^2 term is dropped -- argmin-invariant per group).
    dist = c2_ref[...] + jnp.dot(xp_ref[...], wd_ref[...],
                                 preferred_element_type=jnp.float32)   # (TNp, 512)

    lane_k = jax.lax.broadcasted_iota(jnp.int32, (1, _K), 1)           # (1, 128)
    onehots = []
    for j in range(_PACK):  # static unroll (4): lane-aligned 128-wide group slices
        grp = dist[:, j * _K:(j + 1) * _K]                             # (TNp, 128)
        idx = jnp.argmin(grp, axis=-1, keepdims=True).astype(jnp.int32)  # (TNp, 1)
        onehots.append((lane_k == idx).astype(jnp.float32))            # (TNp, 128)
    onehot = jnp.concatenate(onehots, axis=-1)                         # (TNp, 512)

    # f32 one-hot @ block-diag(codebook) -> exact codebook rows, lane-dense store
    q_ref[...] = jnp.dot(onehot, wg_ref[...], preferred_element_type=jnp.float32)


def _ceil_to(x, m):
    return ((x + m - 1) // m) * m


def vq_pallas(latent_flat, codebook, *, tile_packed_rows=1024):
    """latent_flat: (N, D) f32, codebook: (K, D) f32 -> quantized (N, D) f32."""
    N, D = latent_flat.shape
    K, _ = codebook.shape
    assert D == _D and K == _K, "kernel is specialised to the module constants"
    latent_flat = latent_flat.astype(jnp.float32)
    codebook = codebook.astype(jnp.float32)

    # ---- wrapper-side packing: lane-dense, block-diagonal codebook matrices ----
    eye = jnp.eye(_PACK, dtype=jnp.float32)
    # W_dist[(j,d),(j',k)]   = -2 * delta(j,j') * codebook[k, d]   -> (128, 512) bf16
    w_dist = (-2.0 * eye[:, None, :, None]
              * codebook.T[None, :, None, :]).reshape(_LD, _LK).astype(jnp.bfloat16)
    # W_gather[(j,k),(j',d)] =      delta(j,j') * codebook[k, d]   -> (512, 128) f32
    w_gather = (eye[:, None, :, None]
                * codebook[None, :, None, :]).reshape(_LK, _LD)
    c2 = jnp.sum(codebook * codebook, axis=-1)                        # (K,)
    c2_packed = jnp.tile(c2, _PACK)[None, :]                          # (1, 512) f32

    # ---- tiling: 8-aligned packed rows, minimal padding, >=2 parallel steps ----
    np8 = _ceil_to(pl.cdiv(N, _PACK), 8)          # 8-aligned packed-row count
    cap = max(8, _ceil_to(min(tile_packed_rows, np8), 8))
    g = pl.cdiv(np8, cap)
    if np8 >= 16:
        g = max(g, 2)                              # keep both v7x TCs busy
    tnp = _ceil_to(pl.cdiv(np8, g), 8)             # balanced 8-aligned tile
    np_rows = g * tnp                              # padding < 8 rows per step
    n_pad = np_rows * _PACK
    if n_pad != N:
        latent_flat = jnp.concatenate(
            [latent_flat, jnp.zeros((n_pad - N, D), jnp.float32)], axis=0)
    x_packed = latent_flat.reshape(np_rows, _LD).astype(jnp.bfloat16)

    q_packed = pl.pallas_call(
        _vq_kernel,
        out_shape=jax.ShapeDtypeStruct((np_rows, _LD), jnp.float32),
        grid=(g,),
        in_specs=[
            pl.BlockSpec((tnp, _LD), lambda i: (i, 0)),   # packed latent tile
            pl.BlockSpec((_LD, _LK), lambda i: (0, 0)),   # W_dist   (VMEM resident)
            pl.BlockSpec((_LK, _LD), lambda i: (0, 0)),   # W_gather (VMEM resident)
            pl.BlockSpec((1, _LK), lambda i: (0, 0)),     # c2       (VMEM resident)
        ],
        out_specs=pl.BlockSpec((tnp, _LD), lambda i: (i, 0)),
        compiler_params=pltpu.CompilerParams(
            dimension_semantics=("parallel",)),           # shards across TCs on v7x
    )(x_packed, w_dist, w_gather, c2_packed)

    return q_packed.reshape(n_pad, D)[:N]


def tran_vector_quantizer_forward(latent, codebook):
    """Mirrors TranVectorQuantizer.forward(latent, generating_from_uniform=False)."""
    B = latent.shape[0]
    D = codebook.shape[1]
    latent = latent.astype(jnp.float32)
    latent_flat = latent.reshape(-1, D)

    quantized_latent = vq_pallas(latent_flat, codebook).reshape(latent.shape)

    # straight-through estimator: forward value == quantized_latent
    policy_vq_latent = latent + jax.lax.stop_gradient(quantized_latent - latent)

    # NOTE: for large B, consumers should broadcast the codebook lazily instead
    # of materialising (B, K, D); kept (B is small) to preserve the contract.
    codebook_set = jnp.broadcast_to(codebook[None, :, :], (B,) + codebook.shape)

    return {
        'policy_vq_latent_set': policy_vq_latent,
        'quantized_policy_latent_set': quantized_latent,
        'codebook_set': codebook_set,
    }
    # TODO(synk): generating_from_uniform=True path (random one-hot sampling) is
    # host-side RNG glue, not a kernel hot path; omitted here.


if __name__ == "__main__":
    key = jax.random.PRNGKey(0)
    k_cb, k_lat = jax.random.split(key)

    # deterministic codebook init, matching uniform_(-1/codebook_size, 1/codebook_size)
    codebook = jax.random.uniform(
        k_cb, (tvq_codebook_size, tvq_embedding_dim),
        minval=-1.0 / tvq_codebook_size, maxval=1.0 / tvq_codebook_size,
        dtype=jnp.float32)

    # latent: (batch=2, latent_size=8, embedding_dim=32)
    latent = jax.random.normal(
        k_lat, (2, tvq_latent_size, tvq_embedding_dim), dtype=jnp.float32)

    out = tran_vector_quantizer_forward(latent, codebook)
    jax.block_until_ready(out)

    # ---- sanity checks (tolerant to bf16 near-tie argmin flips) ----
    lf = latent.reshape(-1, tvq_embedding_dim)
    q = out['quantized_policy_latent_set'].reshape(-1, tvq_embedding_dim)

    # 1) every quantized row must be an (essentially exact) codebook row
    row_err = jnp.min(jnp.sum((q[:, None, :] - codebook[None, :, :]) ** 2, -1), -1)
    assert bool(jnp.all(row_err < 1e-8)), "quantized rows are not codebook rows"

    # 2) selected code's true f32 distance is within bf16 rounding of the minimum
    true_d = jnp.sum((lf[:, None, :] - codebook[None, :, :]) ** 2, -1)   # (N, K)
    d_min = jnp.min(true_d, axis=-1)
    d_sel = jnp.sum((lf - q) ** 2, axis=-1)
    assert bool(jnp.all(d_sel <= d_min + 5e-3)), "argmin deviates beyond bf16 tolerance"

    # 3) straight-through forward value equals the quantized latent
    assert jnp.allclose(out['policy_vq_latent_set'],
                        out['quantized_policy_latent_set'], atol=1e-5)
    assert out['codebook_set'].shape == (2, tvq_codebook_size, tvq_embedding_dim)

    print("KERNEL_OK")
</pallas_src>

<mosaic_0001>
module attributes {stable_mosaic.version = 11 : i64} {
  func.func @_vq_kernel(%arg0: i32, %arg1: memref<8x128xbf16, #tpu.memory_space<vmem>>, %arg2: memref<128x512xbf16, #tpu.memory_space<vmem>>, %arg3: memref<512x128xf32, #tpu.memory_space<vmem>>, %arg4: memref<1x512xf32, #tpu.memory_space<vmem>>, %arg5: memref<8x128xf32, #tpu.memory_space<vmem>>) attributes {dimension_semantics = [#tpu.dimension_semantics<parallel>], iteration_bounds = array<i64: 1>, scalar_prefetch = 0 : i64, scratch_operands = 0 : i64, tpu.core_type = #tpu.core_type<tc>, window_params = [{transform_indices = @transform_0, window_bounds = array<i64: 8, 128>}, {pipeline_mode = #tpu.pipeline_mode<synchronous>, transform_indices = @transform_1, window_bounds = array<i64: 128, 512>}, {pipeline_mode = #tpu.pipeline_mode<synchronous>, transform_indices = @transform_2, window_bounds = array<i64: 512, 128>}, {pipeline_mode = #tpu.pipeline_mode<synchronous>, transform_indices = @transform_3, window_bounds = array<i64: 1, 512>}, {transform_indices = @transform_4, window_bounds = array<i64: 8, 128>}]} {
    %c0 = arith.constant 0 : index
    %c0_0 = arith.constant 0 : index
    %0 = vector.load %arg4[%c0, %c0_0] : memref<1x512xf32, #tpu.memory_space<vmem>>, vector<1x512xf32>
    %c0_1 = arith.constant 0 : index
    %c0_2 = arith.constant 0 : index
    %1 = vector.load %arg1[%c0_1, %c0_2] : memref<8x128xbf16, #tpu.memory_space<vmem>>, vector<8x128xbf16>
    %c0_3 = arith.constant 0 : index
    %c0_4 = arith.constant 0 : index
    %2 = vector.load %arg2[%c0_3, %c0_4] : memref<128x512xbf16, #tpu.memory_space<vmem>>, vector<128x512xbf16>
    %cst = arith.constant dense<0.000000e+00> : vector<8x512xf32>
    %3 = tpu.matmul %1, %2, %cst {dimension_numbers = #tpu.dot_dimension_numbers<[1], [0], [0], [1], [0, 0, 1, 1], [], []>} : vector<8x128xbf16>, vector<128x512xbf16>, vector<8x512xf32> -> vector<8x512xf32>
    %4 = vector.broadcast %0 : vector<1x512xf32> to vector<8x512xf32>
    %5 = arith.addf %4, %3 : vector<8x512xf32>
    %6 = tpu.iota {dimensions = array<i32: 1>} : vector<1x128xi32>
    %7 = vector.extract_strided_slice %5 {offsets = [0, 0], sizes = [8, 128], strides = [1, 1]} : vector<8x512xf32> to vector<8x128xf32>
    %8 = tpu.reduce_index %7 {axis = 1 : i32, kind = #tpu.reduction_kind<arg_min>} : vector<8x128xf32> -> vector<8xi32>
    %9 = vector.shape_cast %8 : vector<8xi32> to vector<8x1xi32>
    %10 = vector.broadcast %6 : vector<1x128xi32> to vector<8x128xi32>
    %11 = vector.broadcast %9 : vector<8x1xi32> to vector<8x128xi32>
    %12 = arith.cmpi eq, %10, %11 : vector<8x128xi32>
    %13 = arith.extui %12 : vector<8x128xi1> to vector<8x128xi32>
    %14 = arith.sitofp %13 : vector<8x128xi32> to vector<8x128xf32>
    %15 = vector.extract_strided_slice %5 {offsets = [0, 128], sizes = [8, 128], strides = [1, 1]} : vector<8x512xf32> to vector<8x128xf32>
    %16 = tpu.reduce_index %15 {axis = 1 : i32, kind = #tpu.reduction_kind<arg_min>} : vector<8x128xf32> -> vector<8xi32>
    %17 = vector.shape_cast %16 : vector<8xi32> to vector<8x1xi32>
    %18 = vector.broadcast %6 : vector<1x128xi32> to vector<8x128xi32>
    %19 = vector.broadcast %17 : vector<8x1xi32> to vector<8x128xi32>
    %20 = arith.cmpi eq, %18, %19 : vector<8x128xi32>
    %21 = arith.extui %20 : vector<8x128xi1> to vector<8x128xi32>
    %22 = arith.sitofp %21 : vector<8x128xi32> to vector<8x128xf32>
    %23 = vector.extract_strided_slice %5 {offsets = [0, 256], sizes = [8, 128], strides = [1, 1]} : vector<8x512xf32> to vector<8x128xf32>
    %24 = tpu.reduce_index %23 {axis = 1 : i32, kind = #tpu.reduction_kind<arg_min>} : vector<8x128xf32> -> vector<8xi32>
    %25 = vector.shape_cast %24 : vector<8xi32> to vector<8x1xi32>
    %26 = vector.broadcast %6 : vector<1x128xi32> to vector<8x128xi32>
    %27 = vector.broadcast %25 : vector<8x1xi32> to vector<8x128xi32>
    %28 = arith.cmpi eq, %26, %27 : vector<8x128xi32>
    %29 = arith.extui %28 : vector<8x128xi1> to vector<8x128xi32>
    %30 = arith.sitofp %29 : vector<8x128xi32> to vector<8x128xf32>
    %31 = vector.extract_strided_slice %5 {offsets = [0, 384], sizes = [8, 128], strides = [1, 1]} : vector<8x512xf32> to vector<8x128xf32>
    %32 = tpu.reduce_index %31 {axis = 1 : i32, kind = #tpu.reduction_kind<arg_min>} : vector<8x128xf32> -> vector<8xi32>
    %33 = vector.shape_cast %32 : vector<8xi32> to vector<8x1xi32>
    %34 = vector.broadcast %6 : vector<1x128xi32> to vector<8x128xi32>
    %35 = vector.broadcast %33 : vector<8x1xi32> to vector<8x128xi32>
    %36 = arith.cmpi eq, %34, %35 : vector<8x128xi32>
    %37 = arith.extui %36 : vector<8x128xi1> to vector<8x128xi32>
    %38 = arith.sitofp %37 : vector<8x128xi32> to vector<8x128xf32>
    %39 = tpu.concatenate %14, %22, %30, %38 in 1 : vector<8x128xf32>, vector<8x128xf32>, vector<8x128xf32>, vector<8x128xf32> -> vector<8x512xf32>
    %c0_5 = arith.constant 0 : index
    %c0_6 = arith.constant 0 : index
    %40 = vector.load %arg3[%c0_5, %c0_6] : memref<512x128xf32, #tpu.memory_space<vmem>>, vector<512x128xf32>
    %cst_7 = arith.constant dense<0.000000e+00> : vector<8x128xf32>
    %41 = tpu.matmul %39, %40, %cst_7 {dimension_numbers = #tpu.dot_dimension_numbers<[1], [0], [0], [1], [0, 0, 1, 1], [], []>} : vector<8x512xf32>, vector<512x128xf32>, vector<8x128xf32> -> vector<8x128xf32>
    %c0_8 = arith.constant 0 : index
    %c0_9 = arith.constant 0 : index
    %42 = vector.load %arg5[%c0_8, %c0_9] : memref<8x128xf32, #tpu.memory_space<vmem>>, vector<8x128xf32>
    tpu.vector_store %arg5[%c0_8, %c0_9], %41 {strides = array<i32>} : memref<8x128xf32, #tpu.memory_space<vmem>>, vector<8x128xf32>,
    return
  }
  func.func @transform_0(%arg0: i32) -> (i32, i32) {
    %c0_i32 = arith.constant 0 : i32
    %c0_i32_0 = arith.constant 0 : i32
    return %arg0, %c0_i32 : i32, i32
  }
  func.func @transform_1(%arg0: i32) -> (i32, i32) {
    %c0_i32 = arith.constant 0 : i32
    %c0_i32_0 = arith.constant 0 : i32
    %c0_i32_1 = arith.constant 0 : i32
    return %c0_i32, %c0_i32_0 : i32, i32
  }
  func.func @transform_2(%arg0: i32) -> (i32, i32) {
    %c0_i32 = arith.constant 0 : i32
    %c0_i32_0 = arith.constant 0 : i32
    %c0_i32_1 = arith.constant 0 : i32
    return %c0_i32, %c0_i32_0 : i32, i32
  }
  func.func @transform_3(%arg0: i32) -> (i32, i32) {
    %c0_i32 = arith.constant 0 : i32
    %c0_i32_0 = arith.constant 0 : i32
    %c0_i32_1 = arith.constant 0 : i32
    return %c0_i32, %c0_i32_0 : i32, i32
  }
  func.func @transform_4(%arg0: i32) -> (i32, i32) {
    %c0_i32 = arith.constant 0 : i32
    %c0_i32_0 = arith.constant 0 : i32
    return %arg0, %c0_i32 : i32, i32
  }
}

</mosaic_0001>

<llo_original>
// kernel: tpu_custom_call.1
$region0: #{tpu_custom_call.1}
  #allocation0 [shape = 'u32[]', space=smem, size = 0x4, offset = 0x4, fixed_abs, tag = 'smem constant byte address 0x4 - core index']
  #allocation1 [shape = 'u32[144,128]{1,0:T(1,128)}', space=vmem, size = 0x12000, scoped, tag = 'internal scratch']
  %s0 = inlined_call_operand.hbm [shape: bf16[8,128], index: 0, kind: input, shape index: {}]
  %s1 = inlined_call_operand.hbm [shape: bf16[128,512], index: 1, kind: input, shape index: {}]
  %s2 = inlined_call_operand.hbm [shape: f32[512,128], index: 2, kind: input, shape index: {}]
  %s3 = inlined_call_operand.vmem [shape: f32[1,512], index: 3, kind: input, shape index: {}]
  %s4 = inlined_call_operand.hbm [shape: f32[8,128], index: 4, kind: output, shape index: {}]
  %s5 = sld [smem:[#allocation0]]
  $region38: #{tpu_custom_call.1} parent=0
    _
  %s7 = ssub.s32 1, %s5
  %s8 = scalar_select 0, %s7, %s5
  $region1: #{tpu_custom_call.1} parent=0
    #allocation2 [shape = 'u8[2048]{0}', space=vmem, size = 0x800, scoped, tag = 'input window, operand 0, single buffered']
    #allocation3 [shape = 's32[1]{0}', space=sflag, size = 0x4, scoped, tag = 'scoped memory for tpu_custom_call.1']
    #allocation4 [shape = 's32[1]{0}', space=sflag, size = 0x4, scoped, tag = 'scoped memory for tpu_custom_call.1']
    #allocation5 [shape = 'u8[131072]{0}', space=vmem, size = 0x20000, scoped, tag = 'input window, operand 1, single buffered']
    #allocation6 [shape = 's32[1]{0}', space=sflag, size = 0x4, scoped, tag = 'scoped memory for tpu_custom_call.1']
    #allocation7 [shape = 'u8[262144]{0}', space=vmem, size = 0x40000, scoped, tag = 'input window, operand 2, single buffered']
    #allocation8 [shape = 'u8[4096]{0}', space=vmem, size = 0x1000, scoped, tag = 'output window, operand 0, single buffered']
    %9 = vsyncpa [#allocation3], 0
    %10 = vsyncpa [#allocation6], 0
    %11 = vsyncpa [#allocation4], 0
    // Predicated region
    $region2: #{tpu_custom_call.1} parent=1 // pred_check
      _
    $region3: #{tpu_custom_call.1} parent=1 // pred_check_branch
      %13 = sbr.rel (0) target = $region5
    $region4: #{tpu_custom_call.1} parent=1 // pred_region
      %s15 = ssub.s32 64, 64
      %16 = vsyncadd [#allocation3], %s15
      %s18 = sshll.u32 [#allocation2], 4
      %s19 = int_to_ptr.vmem [resolvable:$true] %s18
      %21 = dma.hbm_to_vmem [thread:$0]  %s0, 64, %s19, [#allocation3]
    $region5: #{tpu_custom_call.1} parent=1 // pred_fallthru
      _
    // Predicated region
    $region6: #{tpu_custom_call.1} parent=1 // pred_check
      _
    $region7: #{tpu_custom_call.1} parent=1 // pred_check_branch
      %23 = sbr.rel (0) target = $region9
    $region8: #{tpu_custom_call.1} parent=1 // pred_region
      %s25 = ssub.s32 4096, 4096
      %26 = vsyncadd [#allocation6], %s25
      %s27 = sshll.u32 [#allocation5], 4
      %s28 = int_to_ptr.vmem [resolvable:$true] %s27
      %33 = dma.hbm_to_vmem [thread:$0]  %s1, 4096, %s28, [#allocation6], 256, 256, 16
    $region9: #{tpu_custom_call.1} parent=1 // pred_fallthru
      _
    // Predicated region
    $region10: #{tpu_custom_call.1} parent=1 // pred_check
      _
    $region11: #{tpu_custom_call.1} parent=1 // pred_check_branch
      %35 = sbr.rel (0) target = $region13
    $region12: #{tpu_custom_call.1} parent=1 // pred_region
      %s37 = ssub.s32 8192, 8192
      %38 = vsyncadd [#allocation6], %s37
      %s39 = sshll.u32 [#allocation7], 4
      %s40 = int_to_ptr.vmem [resolvable:$true] %s39
      %45 = dma.hbm_to_vmem [thread:$0]  %s2, 8192, %s40, [#allocation6], 128, 128, 8
    $region13: #{tpu_custom_call.1} parent=1 // pred_fallthru
      _
    // Predicated region
    $region14: #{tpu_custom_call.1} parent=1 // pred_check
      _
    $region15: #{tpu_custom_call.1} parent=1 // pred_check_branch
      %47 = sbr.rel (0) target = $region17
    $region16: #{tpu_custom_call.1} parent=1 // pred_region
      _
    $region17: #{tpu_custom_call.1} parent=1 // pred_fallthru
      _
    // Predicated region
    $region18: #{tpu_custom_call.1} parent=1 // pred_check
      _
    $region19: #{tpu_custom_call.1} parent=1 // pred_check_branch
      %49 = sbr.rel (0) target = $region21
    $region20: #{tpu_custom_call.1} parent=1 // pred_region
      %50 = dma.done [#allocation3], 64
    $region21: #{tpu_custom_call.1} parent=1 // pred_fallthru
      _
    // Predicated region
    $region22: #{tpu_custom_call.1} parent=1 // pred_check
      _
    $region23: #{tpu_custom_call.1} parent=1 // pred_check_branch
      %52 = sbr.rel (0) target = $region25
    $region24: #{tpu_custom_call.1} parent=1 // pred_region
      %53 = dma.done [#allocation6], 4096
    $region25: #{tpu_custom_call.1} parent=1 // pred_fallthru
      _
    // Predicated region
    $region26: #{tpu_custom_call.1} parent=1 // pred_check
      _
    $region27: #{tpu_custom_call.1} parent=1 // pred_check_branch
      %55 = sbr.rel (0) target = $region29
    $region28: #{tpu_custom_call.1} parent=1 // pred_region
      %56 = dma.done [#allocation6], 8192
    $region29: #{tpu_custom_call.1} parent=1 // pred_fallthru
      _
    %v58 = vld [vmem:[%s3] sm:$0xf]
    %v59 = vld [vmem:[#allocation2] sm:$0xf]
    %v60 = vld [vmem:[#allocation5] sm:$0xff]
    %v61 = vld [vmem:[#allocation5 + $0x8] sm:$0xff]
    %v62 = vld [vmem:[#allocation5 + $0x10] sm:$0xff]
    %v63 = vld [vmem:[#allocation5 + $0x18] sm:$0xff]
    %v64 = vld [vmem:[#allocation5 + $0x20] sm:$0xff]
    %v65 = vld [vmem:[#allocation5 + $0x28] sm:$0xff]
    %v66 = vld [vmem:[#allocation5 + $0x30] sm:$0xff]
    %v67 = vld [vmem:[#allocation5 + $0x38] sm:$0xff]
    %v68 = vld [vmem:[#allocation5 + $0x40] sm:$0xff]
    %v69 = vld [vmem:[#allocation5 + $0x48] sm:$0xff]
    %v70 = vld [vmem:[#allocation5 + $0x50] sm:$0xff]
    %v71 = vld [vmem:[#allocation5 + $0x58] sm:$0xff]
    %v72 = vld [vmem:[#allocation5 + $0x60] sm:$0xff]
    %v73 = vld [vmem:[#allocation5 + $0x68] sm:$0xff]
    %v74 = vld [vmem:[#allocation5 + $0x70] sm:$0xff]
    %v75 = vld [vmem:[#allocation5 + $0x78] sm:$0xff]
    %v76 = vld [vmem:[#allocation5 + $0x80] sm:$0xff]
    %v77 = vld [vmem:[#allocation5 + $0x88] sm:$0xff]
    %v78 = vld [vmem:[#allocation5 + $0x90] sm:$0xff]
    %v79 = vld [vmem:[#allocation5 + $0x98] sm:$0xff]
    %v80 = vld [vmem:[#allocation5 + $0xa0] sm:$0xff]
    %v81 = vld [vmem:[#allocation5 + $0xa8] sm:$0xff]
    %v82 = vld [vmem:[#allocation5 + $0xb0] sm:$0xff]
    %v83 = vld [vmem:[#allocation5 + $0xb8] sm:$0xff]
    %v84 = vld [vmem:[#allocation5 + $0xc0] sm:$0xff]
    %v85 = vld [vmem:[#allocation5 + $0xc8] sm:$0xff]
    %v86 = vld [vmem:[#allocation5 + $0xd0] sm:$0xff]
    %v87 = vld [vmem:[#allocation5 + $0xd8] sm:$0xff]
    %v88 = vld [vmem:[#allocation5 + $0xe0] sm:$0xff]
    %v89 = vld [vmem:[#allocation5 + $0xe8] sm:$0xff]
    %v90 = vld [vmem:[#allocation5 + $0xf0] sm:$0xff]
    %v91 = vld [vmem:[#allocation5 + $0xf8] sm:$0xff]
    %v124 = vunpack.c.l.b16 %v60
    %v125 = vunpack.c.h.b16 %v60
    %v126 = vunpack.c.l.b16 %v61
    %v127 = vunpack.c.h.b16 %v61
    %v128 = vunpack.c.l.b16 %v62
    %v129 = vunpack.c.h.b16 %v62
    %v130 = vunpack.c.l.b16 %v63
    %v131 = vunpack.c.h.b16 %v63
    %v132 = vunpack.c.l.b16 %v64
    %v133 = vunpack.c.h.b16 %v64
    %v134 = vunpack.c.l.b16 %v65
    %v135 = vunpack.c.h.b16 %v65
    %v136 = vunpack.c.l.b16 %v66
    %v137 = vunpack.c.h.b16 %v66
    %v138 = vunpack.c.l.b16 %v67
    %v139 = vunpack.c.h.b16 %v67
    %v140 = vunpack.c.l.b16 %v68
    %v141 = vunpack.c.h.b16 %v68
    %v142 = vunpack.c.l.b16 %v69
    %v143 = vunpack.c.h.b16 %v69
    %v144 = vunpack.c.l.b16 %v70
    %v145 = vunpack.c.h.b16 %v70
    %v146 = vunpack.c.l.b16 %v71
    %v147 = vunpack.c.h.b16 %v71
    %v148 = vunpack.c.l.b16 %v72
    %v149 = vunpack.c.h.b16 %v72
    %v150 = vunpack.c.l.b16 %v73
    %v151 = vunpack.c.h.b16 %v73
    %v152 = vunpack.c.l.b16 %v74
    %v153 = vunpack.c.h.b16 %v74
    %v154 = vunpack.c.l.b16 %v75
    %v155 = vunpack.c.h.b16 %v75
    %v156 = vunpack.c.l.b16 %v76
    %v157 = vunpack.c.h.b16 %v76
    %v158 = vunpack.c.l.b16 %v77
    %v159 = vunpack.c.h.b16 %v77
    %v160 = vunpack.c.l.b16 %v78
    %v161 = vunpack.c.h.b16 %v78
    %v162 = vunpack.c.l.b16 %v79
    %v163 = vunpack.c.h.b16 %v79
    %v164 = vunpack.c.l.b16 %v80
    %v165 = vunpack.c.h.b16 %v80
    %v166 = vunpack.c.l.b16 %v81
    %v167 = vunpack.c.h.b16 %v81
    %v168 = vunpack.c.l.b16 %v82
    %v169 = vunpack.c.h.b16 %v82
    %v170 = vunpack.c.l.b16 %v83
    %v171 = vunpack.c.h.b16 %v83
    %v172 = vunpack.c.l.b16 %v84
    %v173 = vunpack.c.h.b16 %v84
    %v174 = vunpack.c.l.b16 %v85
    %v175 = vunpack.c.h.b16 %v85
    %v176 = vunpack.c.l.b16 %v86
    %v177 = vunpack.c.h.b16 %v86
    %v178 = vunpack.c.l.b16 %v87
    %v179 = vunpack.c.h.b16 %v87
    %v180 = vunpack.c.l.b16 %v88
    %v181 = vunpack.c.h.b16 %v88
    %v182 = vunpack.c.l.b16 %v89
    %v183 = vunpack.c.h.b16 %v89
    %v184 = vunpack.c.l.b16 %v90
    %v185 = vunpack.c.h.b16 %v90
    %v186 = vunpack.c.l.b16 %v91
    %v187 = vunpack.c.h.b16 %v91
    %v188 = vpack.c.b16 %v128, %v124
    %v189 = vpack.c.b16 %v129, %v125
    %v190 = vpack.c.b16 %v130, %v126
    %v191 = vpack.c.b16 %v131, %v127
    %v192 = vpack.c.b16 %v136, %v132
    %v193 = vpack.c.b16 %v137, %v133
    %v194 = vpack.c.b16 %v138, %v134
    %v195 = vpack.c.b16 %v139, %v135
    %v196 = vpack.c.b16 %v144, %v140
    %v197 = vpack.c.b16 %v145, %v141
    %v198 = vpack.c.b16 %v146, %v142
    %v199 = vpack.c.b16 %v147, %v143
    %v200 = vpack.c.b16 %v152, %v148
    %v201 = vpack.c.b16 %v153, %v149
    %v202 = vpack.c.b16 %v154, %v150
    %v203 = vpack.c.b16 %v155, %v151
    %v204 = vpack.c.b16 %v160, %v156
    %v205 = vpack.c.b16 %v161, %v157
    %v206 = vpack.c.b16 %v162, %v158
    %v207 = vpack.c.b16 %v163, %v159
    %v208 = vpack.c.b16 %v168, %v164
    %v209 = vpack.c.b16 %v169, %v165
    %v210 = vpack.c.b16 %v170, %v166
    %v211 = vpack.c.b16 %v171, %v167
    %v212 = vpack.c.b16 %v176, %v172
    %v213 = vpack.c.b16 %v177, %v173
    %v214 = vpack.c.b16 %v178, %v174
    %v215 = vpack.c.b16 %v179, %v175
    %v216 = vpack.c.b16 %v184, %v180
    %v217 = vpack.c.b16 %v185, %v181
    %v218 = vpack.c.b16 %v186, %v182
    %v219 = vpack.c.b16 %v187, %v183
    %252 = vmatprep.subr.bf16.mxu0 %v189
    %253 = vmatpush1.bf16.msra.mxu0 %v188
    %254 = vmatprep.subr.bf16.mxu0 %v193
    %255 = vmatpush1.bf16.msra.mxu0 %v192
    %256 = vmatprep.subr.bf16.mxu0 %v197
    %257 = vmatpush1.bf16.msra.mxu0 %v196
    %258 = vmatprep.subr.bf16.mxu0 %v201
    %259 = vmatpush1.bf16.msra.mxu0 %v200
    %260 = vmatprep.subr.bf16.mxu0 %v205
    %261 = vmatpush1.bf16.msra.mxu0 %v204
    %262 = vmatprep.subr.bf16.mxu0 %v209
    %263 = vmatpush1.bf16.msra.mxu0 %v208
    %264 = vmatprep.subr.bf16.mxu0 %v213
    %265 = vmatpush1.bf16.msra.mxu0 %v212
    %266 = vmatprep.subr.bf16.mxu0 %v217
    %267 = vmatpush1.bf16.msra.mxu0 %v216
    %268 = vmatprep.subr.bf16.mxu0 0
    %269 = vmatpush1.bf16.msra.mxu0 0
    %270 = vmatprep.subr.bf16.mxu0 0
    %271 = vmatpush1.bf16.msra.mxu0 0
    %272 = vmatprep.subr.bf16.mxu0 0
    %273 = vmatpush1.bf16.msra.mxu0 0
    %274 = vmatprep.subr.bf16.mxu0 0
    %275 = vmatpush1.bf16.msra.mxu0 0
    %276 = vmatprep.subr.bf16.mxu0 0
    %277 = vmatpush1.bf16.msra.mxu0 0
    %278 = vmatprep.subr.bf16.mxu0 0
    %279 = vmatpush1.bf16.msra.mxu0 0
    %280 = vmatprep.subr.bf16.mxu0 0
    %281 = vmatpush1.bf16.msra.mxu0 0
    %282 = vmatprep.subr.bf16.mxu0 0
    %283 = vmatpush1.bf16.msra.mxu0 0
    %284 = vmatprep.mubr.bf16.mxu0 0
    %285 = vmatmul.mubr.bf16.gmra.mrb[0].mxu0 %v59
    %v286 = vpop.f32.mrb[0].mxu0
    %v287 = vadd.f32 0.0, %v286
    %v288 = vpop.f32.mrb[0].mxu0
    %v289 = vadd.f32 0.0, %v288
    %v290 = vpop.f32.mrb[0].mxu0
    %v291 = vpop.f32.mrb[0].mxu0
    %292 = vdwg.mxu0
    %293 = vmatprep.subr.bf16.mxu0 %v191
    %294 = vmatpush1.bf16.msra.mxu0 %v190
    %295 = vmatprep.subr.bf16.mxu0 %v195
    %296 = vmatpush1.bf16.msra.mxu0 %v194
    %297 = vmatprep.subr.bf16.mxu0 %v199
    %298 = vmatpush1.bf16.msra.mxu0 %v198
    %299 = vmatprep.subr.bf16.mxu0 %v203
    %300 = vmatpush1.bf16.msra.mxu0 %v202
    %301 = vmatprep.subr.bf16.mxu0 %v207
    %302 = vmatpush1.bf16.msra.mxu0 %v206
    %303 = vmatprep.subr.bf16.mxu0 %v211
    %304 = vmatpush1.bf16.msra.mxu0 %v210
    %305 = vmatprep.subr.bf16.mxu0 %v215
    %306 = vmatpush1.bf16.msra.mxu0 %v214
    %307 = vmatprep.subr.bf16.mxu0 %v219
    %308 = vmatpush1.bf16.msra.mxu0 %v218
    %309 = vmatprep.subr.bf16.mxu0 0
    %310 = vmatpush1.bf16.msra.mxu0 0
    %311 = vmatprep.subr.bf16.mxu0 0
    %312 = vmatpush1.bf16.msra.mxu0 0
    %313 = vmatprep.subr.bf16.mxu0 0
    %314 = vmatpush1.bf16.msra.mxu0 0
    %315 = vmatprep.subr.bf16.mxu0 0
    %316 = vmatpush1.bf16.msra.mxu0 0
    %317 = vmatprep.subr.bf16.mxu0 0
    %318 = vmatpush1.bf16.msra.mxu0 0
    %319 = vmatprep.subr.bf16.mxu0 0
    %320 = vmatpush1.bf16.msra.mxu0 0
    %321 = vmatprep.subr.bf16.mxu0 0
    %322 = vmatpush1.bf16.msra.mxu0 0
    %323 = vmatprep.subr.bf16.mxu0 0
    %324 = vmatpush1.bf16.msra.mxu0 0
    %325 = vmatprep.mubr.bf16.mxu0 0
    %326 = vmatmul.mubr.bf16.gmra.mrb[0].mxu0 %v59
    %v327 = vpop.f32.mrb[0].mxu0
    %v328 = vadd.f32 0.0, %v327
    %v329 = vpop.f32.mrb[0].mxu0
    %v330 = vadd.f32 0.0, %v329
    %v331 = vpop.f32.mrb[0].mxu0
    %v332 = vpop.f32.mrb[0].mxu0
    %333 = vdwg.mxu0
    %v335 = vlaneseq
    %v336 = vshrl.u32 %v335, 7
    %v337 = vsub.s32 0, %v336
    %v338 = vrot.slane %v58, %v337
    %v339 = vlaneseq
    %v340 = vshrl.u32 %v339, 7
    %v341 = vsub.s32 1, %v340
    %v342 = vrot.slane %v58, %v341
    %v343 = vlaneseq
    %v344 = vshrl.u32 %v343, 7
    %v345 = vsub.s32 2, %v344
    %v346 = vrot.slane %v58, %v345
    %v347 = vlaneseq
    %v348 = vshrl.u32 %v347, 7
    %v349 = vsub.s32 3, %v348
    %v350 = vrot.slane %v58, %v349
    %v355 = vadd.f32 %v338, %v287
    %v356 = vadd.f32 %v342, %v289
    %v357 = vadd.f32 %v346, %v328
    %v358 = vadd.f32 %v350, %v330
    %v359 = vlaneseq
    %v360 = vand.u32 %v359, 127
    %361 = vmin.index.xlane.f32.xlu0 %v355
    %v362 = vpop.xlane.xlu0 %361
    %vm363 = vcmp.eq.s32.totalorder %v360, %v362
    %v364 = vsel %vm363, 1, 0
    %v365 = vcvt.s32.f32 %v364
    %366 = vmin.index.xlane.f32.xlu0 %v356
    %v367 = vpop.xlane.xlu0 %366
    %vm368 = vcmp.eq.s32.totalorder %v360, %v367
    %v369 = vsel %vm368, 1, 0
    %v370 = vcvt.s32.f32 %v369
    %371 = vmin.index.xlane.f32.xlu0 %v357
    %v372 = vpop.xlane.xlu0 %371
    %vm373 = vcmp.eq.s32.totalorder %v360, %v372
    %v374 = vsel %vm373, 1, 0
    %v375 = vcvt.s32.f32 %v374
    %376 = vmin.index.xlane.f32.xlu0 %v358
    %v377 = vpop.xlane.xlu0 %376
    %vm378 = vcmp.eq.s32.totalorder %v360, %v377
    %v379 = vsel %vm378, 1, 0
    %v380 = vcvt.s32.f32 %v379
    %v381 = vld [vmem:[#allocation7] sm:$0xff]
    %v382 = vld [vmem:[#allocation7 + $0x8] sm:$0xff]
    %v383 = vld [vmem:[#allocation7 + $0x10] sm:$0xff]
    %v384 = vld [vmem:[#allocation7 + $0x18] sm:$0xff]
    %v385 = vld [vmem:[#allocation7 + $0x20] sm:$0xff]
    %v386 = vld [vmem:[#allocation7 + $0x28] sm:$0xff]
    %v387 = vld [vmem:[#allocation7 + $0x30] sm:$0xff]
    %v388 = vld [vmem:[#allocation7 + $0x38] sm:$0xff]
    %v389 = vld [vmem:[#allocation7 + $0x40] sm:$0xff]
    %v390 = vld [vmem:[#allocation7 + $0x48] sm:$0xff]
    %v391 = vld [vmem:[#allocation7 + $0x50] sm:$0xff]
    %v392 = vld [vmem:[#allocation7 + $0x58] sm:$0xff]
    %v393 = vld [vmem:[#allocation7 + $0x60] sm:$0xff]
    %v394 = vld [vmem:[#allocation7 + $0x68] sm:$0xff]
    %v395 = vld [vmem:[#allocation7 + $0x70] sm:$0xff]
    %v396 = vld [vmem:[#allocation7 + $0x78] sm:$0xff]
    %v397 = vld [vmem:[#allocation7 + $0x80] sm:$0xff]
    %v398 = vld [vmem:[#allocation7 + $0x88] sm:$0xff]
    %v399 = vld [vmem:[#allocation7 + $0x90] sm:$0xff]
    %v400 = vld [vmem:[#allocation7 + $0x98] sm:$0xff]
    %v401 = vld [vmem:[#allocation7 + $0xa0] sm:$0xff]
    %v402 = vld [vmem:[#allocation7 + $0xa8] sm:$0xff]
    %v403 = vld [vmem:[#allocation7 + $0xb0] sm:$0xff]
    %v404 = vld [vmem:[#allocation7 + $0xb8] sm:$0xff]
    %v405 = vld [vmem:[#allocation7 + $0xc0] sm:$0xff]
    %v406 = vld [vmem:[#allocation7 + $0xc8] sm:$0xff]
    %v407 = vld [vmem:[#allocation7 + $0xd0] sm:$0xff]
    %v408 = vld [vmem:[#allocation7 + $0xd8] sm:$0xff]
    %v409 = vld [vmem:[#allocation7 + $0xe0] sm:$0xff]
    %v410 = vld [vmem:[#allocation7 + $0xe8] sm:$0xff]
    %v411 = vld [vmem:[#allocation7 + $0xf0] sm:$0xff]
    %v412 = vld [vmem:[#allocation7 + $0xf8] sm:$0xff]
    %v413 = vld [vmem:[#allocation7 + $0x100] sm:$0xff]
    %v414 = vld [vmem:[#allocation7 + $0x108] sm:$0xff]
    %v415 = vld [vmem:[#allocation7 + $0x110] sm:$0xff]
    %v416 = vld [vmem:[#allocation7 + $0x118] sm:$0xff]
    %v417 = vld [vmem:[#allocation7 + $0x120] sm:$0xff]
    %v418 = vld [vmem:[#allocation7 + $0x128] sm:$0xff]
    %v419 = vld [vmem:[#allocation7 + $0x130] sm:$0xff]
    %v420 = vld [vmem:[#allocation7 + $0x138] sm:$0xff]
    %v421 = vld [vmem:[#allocation7 + $0x140] sm:$0xff]
    %v422 = vld [vmem:[#allocation7 + $0x148] sm:$0xff]
    %v423 = vld [vmem:[#allocation7 + $0x150] sm:$0xff]
    %v424 = vld [vmem:[#allocation7 + $0x158] sm:$0xff]
    %v425 = vld [vmem:[#allocation7 + $0x160] sm:$0xff]
    %v426 = vld [vmem:[#allocation7 + $0x168] sm:$0xff]
    %v427 = vld [vmem:[#allocation7 + $0x170] sm:$0xff]
    %v428 = vld [vmem:[#allocation7 + $0x178] sm:$0xff]
    %v429 = vld [vmem:[#allocation7 + $0x180] sm:$0xff]
    %v430 = vld [vmem:[#allocation7 + $0x188] sm:$0xff]
    %v431 = vld [vmem:[#allocation7 + $0x190] sm:$0xff]
    %v432 = vld [vmem:[#allocation7 + $0x198] sm:$0xff]
    %v433 = vld [vmem:[#allocation7 + $0x1a0] sm:$0xff]
    %v434 = vld [vmem:[#allocation7 + $0x1a8] sm:$0xff]
    %v435 = vld [vmem:[#allocation7 + $0x1b0] sm:$0xff]
    %v436 = vld [vmem:[#allocation7 + $0x1b8] sm:$0xff]
    %v437 = vld [vmem:[#allocation7 + $0x1c0] sm:$0xff]
    %v438 = vld [vmem:[#allocation7 + $0x1c8] sm:$0xff]
    %v439 = vld [vmem:[#allocation7 + $0x1d0] sm:$0xff]
    %v440 = vld [vmem:[#allocation7 + $0x1d8] sm:$0xff]
    %v441 = vld [vmem:[#allocation7 + $0x1e0] sm:$0xff]
    %v442 = vld [vmem:[#allocation7 + $0x1e8] sm:$0xff]
    %v443 = vld [vmem:[#allocation7 + $0x1f0] sm:$0xff]
    %v444 = vld [vmem:[#allocation7 + $0x1f8] sm:$0xff]
    %445 = vmatprep.subr.mxu0 0.0
    %446 = vmatpush1.msra.mxu0 %v381
    %447 = vmatprep.subr.mxu0 0.0
    %448 = vmatpush1.msra.mxu0 %v382
    %449 = vmatprep.subr.mxu0 0.0
    %450 = vmatpush1.msra.mxu0 %v383
    %451 = vmatprep.subr.mxu0 0.0
    %452 = vmatpush1.msra.mxu0 %v384
    %453 = vmatprep.subr.mxu0 0.0
    %454 = vmatpush1.msra.mxu0 %v385
    %455 = vmatprep.subr.mxu0 0.0
    %456 = vmatpush1.msra.mxu0 %v386
    %457 = vmatprep.subr.mxu0 0.0
    %458 = vmatpush1.msra.mxu0 %v387
    %459 = vmatprep.subr.mxu0 0.0
    %460 = vmatpush1.msra.mxu0 %v388
    %461 = vmatprep.subr.mxu0 0.0
    %462 = vmatpush1.msra.mxu0 %v389
    %463 = vmatprep.subr.mxu0 0.0
    %464 = vmatpush1.msra.mxu0 %v390
    %465 = vmatprep.subr.mxu0 0.0
    %466 = vmatpush1.msra.mxu0 %v391
    %467 = vmatprep.subr.mxu0 0.0
    %468 = vmatpush1.msra.mxu0 %v392
    %469 = vmatprep.subr.mxu0 0.0
    %470 = vmatpush1.msra.mxu0 %v393
    %471 = vmatprep.subr.mxu0 0.0
    %472 = vmatpush1.msra.mxu0 %v394
    %473 = vmatprep.subr.mxu0 0.0
    %474 = vmatpush1.msra.mxu0 %v395
    %475 = vmatprep.subr.mxu0 0.0
    %476 = vmatpush1.msra.mxu0 %v396
    %477 = vmatprep.subr.mxu0 0.0
    %478 = vmatpush1.msra.mxu0 %v397
    %479 = vmatprep.subr.mxu0 0.0
    %480 = vmatpush1.msra.mxu0 %v398
    %481 = vmatprep.subr.mxu0 0.0
    %482 = vmatpush1.msra.mxu0 %v399
    %483 = vmatprep.subr.mxu0 0.0
    %484 = vmatpush1.msra.mxu0 %v400
    %485 = vmatprep.subr.mxu0 0.0
    %486 = vmatpush1.msra.mxu0 %v401
    %487 = vmatprep.subr.mxu0 0.0
    %488 = vmatpush1.msra.mxu0 %v402
    %489 = vmatprep.subr.mxu0 0.0
    %490 = vmatpush1.msra.mxu0 %v403
    %491 = vmatprep.subr.mxu0 0.0
    %492 = vmatpush1.msra.mxu0 %v404
    %493 = vmatprep.subr.mxu0 0.0
    %494 = vmatpush1.msra.mxu0 %v405
    %495 = vmatprep.subr.mxu0 0.0
    %496 = vmatpush1.msra.mxu0 %v406
    %497 = vmatprep.subr.mxu0 0.0
    %498 = vmatpush1.msra.mxu0 %v407
    %499 = vmatprep.subr.mxu0 0.0
    %500 = vmatpush1.msra.mxu0 %v408
    %501 = vmatprep.subr.mxu0 0.0
    %502 = vmatpush1.msra.mxu0 %v409
    %503 = vmatprep.subr.mxu0 0.0
    %504 = vmatpush1.msra.mxu0 %v410
    %505 = vmatprep.subr.mxu0 0.0
    %506 = vmatpush1.msra.mxu0 %v411
    %507 = vmatprep.subr.mxu0 0.0
    %508 = vmatpush1.msra.mxu0 %v412
    %509 = vmatprep.mubr.f32.mxu0 %v370
    %510 = vmatmul.mubr.f32.gmra.mrb[0].mxu0 %v365
    %v511 = vpop.f32.mrb[0].mxu0
    %v512 = vadd.f32 0.0, %v511
    %v513 = vpop.f32.mrb[0].mxu0
    %514 = vdwg.mxu0
    %515 = vmatprep.subr.mxu0 0.0
    %516 = vmatpush1.msra.mxu0 %v413
    %517 = vmatprep.subr.mxu0 0.0
    %518 = vmatpush1.msra.mxu0 %v414
    %519 = vmatprep.subr.mxu0 0.0
    %520 = vmatpush1.msra.mxu0 %v415
    %521 = vmatprep.subr.mxu0 0.0
    %522 = vmatpush1.msra.mxu0 %v416
    %523 = vmatprep.subr.mxu0 0.0
    %524 = vmatpush1.msra.mxu0 %v417
    %525 = vmatprep.subr.mxu0 0.0
    %526 = vmatpush1.msra.mxu0 %v418
    %527 = vmatprep.subr.mxu0 0.0
    %528 = vmatpush1.msra.mxu0 %v419
    %529 = vmatprep.subr.mxu0 0.0
    %530 = vmatpush1.msra.mxu0 %v420
    %531 = vmatprep.subr.mxu0 0.0
    %532 = vmatpush1.msra.mxu0 %v421
    %533 = vmatprep.subr.mxu0 0.0
    %534 = vmatpush1.msra.mxu0 %v422
    %535 = vmatprep.subr.mxu0 0.0
    %536 = vmatpush1.msra.mxu0 %v423
    %537 = vmatprep.subr.mxu0 0.0
    %538 = vmatpush1.msra.mxu0 %v424
    %539 = vmatprep.subr.mxu0 0.0
    %540 = vmatpush1.msra.mxu0 %v425
    %541 = vmatprep.subr.mxu0 0.0
    %542 = vmatpush1.msra.mxu0 %v426
    %543 = vmatprep.subr.mxu0 0.0
    %544 = vmatpush1.msra.mxu0 %v427
    %545 = vmatprep.subr.mxu0 0.0
    %546 = vmatpush1.msra.mxu0 %v428
    %547 = vmatprep.subr.mxu0 0.0
    %548 = vmatpush1.msra.mxu0 %v429
    %549 = vmatprep.subr.mxu0 0.0
    %550 = vmatpush1.msra.mxu0 %v430
    %551 = vmatprep.subr.mxu0 0.0
    %552 = vmatpush1.msra.mxu0 %v431
    %553 = vmatprep.subr.mxu0 0.0
    %554 = vmatpush1.msra.mxu0 %v432
    %555 = vmatprep.subr.mxu0 0.0
    %556 = vmatpush1.msra.mxu0 %v433
    %557 = vmatprep.subr.mxu0 0.0
    %558 = vmatpush1.msra.mxu0 %v434
    %559 = vmatprep.subr.mxu0 0.0
    %560 = vmatpush1.msra.mxu0 %v435
    %561 = vmatprep.subr.mxu0 0.0
    %562 = vmatpush1.msra.mxu0 %v436
    %563 = vmatprep.subr.mxu0 0.0
    %564 = vmatpush1.msra.mxu0 %v437
    %565 = vmatprep.subr.mxu0 0.0
    %566 = vmatpush1.msra.mxu0 %v438
    %567 = vmatprep.subr.mxu0 0.0
    %568 = vmatpush1.msra.mxu0 %v439
    %569 = vmatprep.subr.mxu0 0.0
    %570 = vmatpush1.msra.mxu0 %v440
    %571 = vmatprep.subr.mxu0 0.0
    %572 = vmatpush1.msra.mxu0 %v441
    %573 = vmatprep.subr.mxu0 0.0
    %574 = vmatpush1.msra.mxu0 %v442
    %575 = vmatprep.subr.mxu0 0.0
    %576 = vmatpush1.msra.mxu0 %v443
    %577 = vmatprep.subr.mxu0 0.0
    %578 = vmatpush1.msra.mxu0 %v444
    %579 = vmatprep.mubr.f32.mxu0 %v380
    %580 = vmatmul.mubr.f32.gmra.mrb[0].mxu0 %v375
    %v581 = vpop.f32.mrb[0].mxu0
    %v582 = vadd.f32 %v512, %v581
    %v583 = vpop.f32.mrb[0].mxu0
    %584 = vdwg.mxu0
    %585 = vst [vmem:[#allocation8] sm:$0xff] %v582
    // Predicated region
    $region30: #{tpu_custom_call.1} parent=1 // pred_check
      _
    $region31: #{tpu_custom_call.1} parent=1 // pred_check_branch
      %587 = sbr.rel (0) target = $region33
    $region32: #{tpu_custom_call.1} parent=1 // pred_region
      %s589 = ssub.s32 128, 128
      %590 = vsyncadd [#allocation4], %s589
      %s592 = sshll.u32 [#allocation8], 4
      %s593 = int_to_ptr.vmem [resolvable:$true] %s592
      %595 = dma.vmem_to_hbm [thread:$0]  %s593, 128, %s4, [#allocation4]
    $region33: #{tpu_custom_call.1} parent=1 // pred_fallthru
      _
    // Predicated region
    $region34: #{tpu_custom_call.1} parent=1 // pred_check
      _
    $region35: #{tpu_custom_call.1} parent=1 // pred_check_branch
      %597 = sbr.rel (0) target = $region37
    $region36: #{tpu_custom_call.1} parent=1 // pred_region
      %598 = dma.done [#allocation4], 128
    $region37: #{tpu_custom_call.1} parent=1 // pred_fallthru
      _
    %599 = vsyncpa [#allocation3], 1
    %600 = vsyncpa [#allocation6], 1
    %601 = vsyncpa [#allocation4], 1

</llo_original>
